<compile_context>
chip_gen: v7x
topology: tpu7x:2x2x1
jax: 0.10.0
libtpu: 0.0.40
codegen_flags: <defaults>
</compile_context>

<pallas_src>
import jax
import jax.numpy as jnp
from jax.experimental import pallas as pl
from jax.experimental.pallas import tpu as pltpu


def _amujo_mlp_kernel(x_ref, w1_ref, b1_ref, w2_ref, b2_ref, w3_ref, b3_ref, o_ref):
    """One batch tile: fc1+relu -> (dropout=identity) -> fc2+relu -> fc3+sigmoid."""
    # fc1 (MXU, f32 accumulation) + bias + relu.
    h1 = jnp.dot(x_ref[...], w1_ref[...], preferred_element_type=jnp.float32)
    h1 = jnp.maximum(h1 + b1_ref[...], 0.0)                       # (bm, 64)

    # Dropout(p=0.5) is identity in inference / eval() mode.
    # TODO(synk): training-mode dropout would need pltpu.prng_seed + prng_random_bits.

    # fc2 (MXU, f32 accumulation) + bias + relu.
    h2 = jnp.dot(h1, w2_ref[...], preferred_element_type=jnp.float32)
    h2 = jnp.maximum(h2 + b2_ref[...], 0.0)                       # (bm, 32)

    # fc3 has one output column: VPU multiply + lane reduction (frees the MXU)
    # instead of a (bm, 32) @ (32, 1) matmul.  keepdims keeps the natural
    # (bm, 1) layout of the output block -> no cross-lane relayout needed.
    logits = jnp.sum(h2 * w3_ref[...], axis=-1, keepdims=True) + b3_ref[...]   # (bm, 1)
    o_ref[...] = jax.nn.sigmoid(logits).astype(o_ref.dtype)


def _round_up(x, m):
    return -(-x // m) * m


def amujo_ann_forward(x, params, *, block_batch=4096, vmem_limit_bytes=48 * 1024 * 1024):
    """x: (B, input_size) float32.  params: (in,out) weights, (1,out) biases."""
    B, in_dim = x.shape
    w1, b1 = params["w1"], params["b1"]
    w2, b2 = params["w2"], params["b2"]
    w3, b3 = params["w3"], params["b3"]
    h1_dim, h2_dim = w1.shape[1], w2.shape[1]

    # fc3 weights as a lane-major row vector for the VPU reduction; b3 as (1, 1).
    w3_row = w3.T.reshape(1, h2_dim)   # (1, 32), tiny one-off wrapper reshape
    b3_in = b3.reshape(1, 1)

    # --- batch tile size --------------------------------------------------
    bm = min(block_batch, B)
    # v7x has 2 TensorCores sharing HBM: when the batch is big enough, keep the
    # "parallel" grid axis at >= 2 steps so work splits across both cores.
    if B >= 256 and bm > -(-B // 2):
        bm = _round_up(-(-B // 2), 128)
    if bm < B:
        # (8, 128) constraint: a partial-batch block must be a sublane multiple.
        bm = max(8, (bm // 8) * 8)
    num_blocks = pl.cdiv(B, bm)
    # NOTE: no jnp.pad — Pallas handles the ragged last block (rows are
    # independent; out-of-range rows of the final block are masked on store).

    def _const_spec(a):
        # Replicated block with a constant index_map -> stays VMEM-resident
        # across grid steps (no per-step re-DMA of the ~10 KiB of weights).
        return pl.BlockSpec(a.shape, lambda i: (0,) * a.ndim)

    flops = 2 * B * (in_dim * h1_dim + h1_dim * h2_dim + h2_dim)
    bytes_accessed = (
        int(x.size) * x.dtype.itemsize
        + sum(int(a.size) * a.dtype.itemsize
              for a in (w1, b1, w2, b2, w3_row, b3_in))
        + B * 4
    )

    out = pl.pallas_call(
        _amujo_mlp_kernel,
        out_shape=jax.ShapeDtypeStruct((B, 1), jnp.float32),
        grid=(num_blocks,),
        in_specs=[
            pl.BlockSpec((bm, in_dim), lambda i: (i, 0)),   # x batch tile (f32, no pre-pass)
            _const_spec(w1), _const_spec(b1),
            _const_spec(w2), _const_spec(b2),
            _const_spec(w3_row), _const_spec(b3_in),
        ],
        out_specs=pl.BlockSpec((bm, 1), lambda i: (i, 0)),
        compiler_params=pltpu.CompilerParams(
            dimension_semantics=("parallel",),
            vmem_limit_bytes=vmem_limit_bytes,
        ),
        cost_estimate=pl.CostEstimate(
            flops=flops, transcendentals=B, bytes_accessed=bytes_accessed),
    )(x, w1, b1, w2, b2, w3_row, b3_in)

    return out


def init_params(key, input_size):
    """Deterministic synthetic init (PyTorch-style uniform fan-in bounds)."""
    ks = jax.random.split(key, 6)

    def linear(kw, kb, fan_in, fan_out):
        bound = 1.0 / jnp.sqrt(fan_in)
        w = jax.random.uniform(kw, (fan_in, fan_out), jnp.float32, -bound, bound)
        b = jax.random.uniform(kb, (1, fan_out), jnp.float32, -bound, bound)
        return w, b

    w1, b1 = linear(ks[0], ks[1], input_size, 64)
    w2, b2 = linear(ks[2], ks[3], 64, 32)
    w3, b3 = linear(ks[4], ks[5], 32, 1)
    return {"w1": w1, "b1": b1, "w2": w2, "b2": b2, "w3": w3, "b3": b3}


def reference_forward(x, p):
    h1 = jnp.maximum(x @ p["w1"] + p["b1"], 0.0)
    h2 = jnp.maximum(h1 @ p["w2"] + p["b2"], 0.0)
    return jax.nn.sigmoid(h2 @ p["w3"] + p["b3"])


if __name__ == "__main__":
    key = jax.random.PRNGKey(0)
    k_x, k_p, k_x2 = jax.random.split(key, 3)

    batch, input_size = 16, 32
    x = jax.random.normal(k_x, (batch, input_size), dtype=jnp.float32)
    params = init_params(k_p, input_size)

    # Single-block path (bm == B).
    out = jax.block_until_ready(amujo_ann_forward(x, params))
    ref = reference_forward(x, params)
    assert out.shape == (batch, 1)
    max_err = float(jnp.max(jnp.abs(out - ref)))
    assert jnp.allclose(out, ref, atol=1e-4, rtol=1e-4), f"mismatch vs reference: {max_err}"

    # Multi-block + ragged-tail path (grid of 3, last block partially masked).
    batch2 = 20
    x2 = jax.random.normal(k_x2, (batch2, input_size), dtype=jnp.float32)
    out2 = jax.block_until_ready(amujo_ann_forward(x2, params, block_batch=8))
    ref2 = reference_forward(x2, params)
    assert out2.shape == (batch2, 1)
    max_err2 = float(jnp.max(jnp.abs(out2 - ref2)))
    assert jnp.allclose(out2, ref2, atol=1e-4, rtol=1e-4), f"ragged mismatch: {max_err2}"

    print("KERNEL_OK")
</pallas_src>

<mosaic_0001>
module attributes {stable_mosaic.version = 11 : i64} {
  func.func @_amujo_mlp_kernel(%arg0: i32, %arg1: memref<16x32xf32, #tpu.memory_space<vmem>>, %arg2: memref<32x64xf32, #tpu.memory_space<vmem>>, %arg3: memref<1x64xf32, #tpu.memory_space<vmem>>, %arg4: memref<64x32xf32, #tpu.memory_space<vmem>>, %arg5: memref<1x32xf32, #tpu.memory_space<vmem>>, %arg6: memref<1x32xf32, #tpu.memory_space<vmem>>, %arg7: memref<1x1xf32, #tpu.memory_space<vmem>>, %arg8: memref<16x1xf32, #tpu.memory_space<vmem>>) attributes {dimension_semantics = [#tpu.dimension_semantics<parallel>], iteration_bounds = array<i64: 1>, scalar_prefetch = 0 : i64, scratch_operands = 0 : i64, tpu.core_type = #tpu.core_type<tc>, window_params = [{transform_indices = @transform_0, window_bounds = array<i64: 16, 32>}, {pipeline_mode = #tpu.pipeline_mode<synchronous>, transform_indices = @transform_1, window_bounds = array<i64: 32, 64>}, {pipeline_mode = #tpu.pipeline_mode<synchronous>, transform_indices = @transform_2, window_bounds = array<i64: 1, 64>}, {pipeline_mode = #tpu.pipeline_mode<synchronous>, transform_indices = @transform_3, window_bounds = array<i64: 64, 32>}, {pipeline_mode = #tpu.pipeline_mode<synchronous>, transform_indices = @transform_4, window_bounds = array<i64: 1, 32>}, {pipeline_mode = #tpu.pipeline_mode<synchronous>, transform_indices = @transform_5, window_bounds = array<i64: 1, 32>}, {pipeline_mode = #tpu.pipeline_mode<synchronous>, transform_indices = @transform_6, window_bounds = array<i64: 1, 1>}, {transform_indices = @transform_7, window_bounds = array<i64: 16, 1>}]} {
    %c0 = arith.constant 0 : index
    %c0_0 = arith.constant 0 : index
    %0 = vector.load %arg1[%c0, %c0_0] : memref<16x32xf32, #tpu.memory_space<vmem>>, vector<16x32xf32>
    %c0_1 = arith.constant 0 : index
    %c0_2 = arith.constant 0 : index
    %1 = vector.load %arg2[%c0_1, %c0_2] : memref<32x64xf32, #tpu.memory_space<vmem>>, vector<32x64xf32>
    %cst = arith.constant dense<0.000000e+00> : vector<16x64xf32>
    %2 = tpu.matmul %0, %1, %cst {dimension_numbers = #tpu.dot_dimension_numbers<[1], [0], [0], [1], [0, 0, 1, 1], [], []>} : vector<16x32xf32>, vector<32x64xf32>, vector<16x64xf32> -> vector<16x64xf32>
    %c0_3 = arith.constant 0 : index
    %c0_4 = arith.constant 0 : index
    %3 = vector.load %arg3[%c0_3, %c0_4] : memref<1x64xf32, #tpu.memory_space<vmem>>, vector<1x64xf32>
    %4 = vector.broadcast %3 : vector<1x64xf32> to vector<16x64xf32>
    %5 = arith.addf %2, %4 : vector<16x64xf32>
    %cst_5 = arith.constant 0.000000e+00 : f32
    %6 = vector.broadcast %cst_5 : f32 to vector<16x64xf32>
    %7 = arith.maximumf %5, %6 : vector<16x64xf32>
    %c0_6 = arith.constant 0 : index
    %c0_7 = arith.constant 0 : index
    %8 = vector.load %arg4[%c0_6, %c0_7] : memref<64x32xf32, #tpu.memory_space<vmem>>, vector<64x32xf32>
    %cst_8 = arith.constant dense<0.000000e+00> : vector<16x32xf32>
    %9 = tpu.matmul %7, %8, %cst_8 {dimension_numbers = #tpu.dot_dimension_numbers<[1], [0], [0], [1], [0, 0, 1, 1], [], []>} : vector<16x64xf32>, vector<64x32xf32>, vector<16x32xf32> -> vector<16x32xf32>
    %c0_9 = arith.constant 0 : index
    %c0_10 = arith.constant 0 : index
    %10 = vector.load %arg5[%c0_9, %c0_10] : memref<1x32xf32, #tpu.memory_space<vmem>>, vector<1x32xf32>
    %11 = vector.broadcast %10 : vector<1x32xf32> to vector<16x32xf32>
    %12 = arith.addf %9, %11 : vector<16x32xf32>
    %cst_11 = arith.constant 0.000000e+00 : f32
    %13 = vector.broadcast %cst_11 : f32 to vector<16x32xf32>
    %14 = arith.maximumf %12, %13 : vector<16x32xf32>
    %c0_12 = arith.constant 0 : index
    %c0_13 = arith.constant 0 : index
    %15 = vector.load %arg6[%c0_12, %c0_13] : memref<1x32xf32, #tpu.memory_space<vmem>>, vector<1x32xf32>
    %16 = vector.broadcast %15 : vector<1x32xf32> to vector<16x32xf32>
    %17 = arith.mulf %14, %16 : vector<16x32xf32>
    %cst_14 = arith.constant dense<0.000000e+00> : vector<16xf32>
    %18 = vector.multi_reduction <add>, %17, %cst_14 [1] : vector<16x32xf32> to vector<16xf32>
    %19 = vector.shape_cast %18 : vector<16xf32> to vector<16x1xf32>
    %c0_15 = arith.constant 0 : index
    %c0_16 = arith.constant 0 : index
    %20 = vector.load %arg7[%c0_15, %c0_16] : memref<1x1xf32, #tpu.memory_space<vmem>>, vector<1x1xf32>
    %21 = vector.broadcast %20 : vector<1x1xf32> to vector<16x1xf32>
    %22 = arith.addf %19, %21 : vector<16x1xf32>
    %23 = arith.negf %22 : vector<16x1xf32>
    %24 = math.exp %23 : vector<16x1xf32>
    %cst_17 = arith.constant 1.000000e+00 : f32
    %25 = vector.broadcast %cst_17 : f32 to vector<16x1xf32>
    %26 = arith.addf %25, %24 : vector<16x1xf32>
    %27 = arith.divf %25, %26 : vector<16x1xf32>
    %c0_18 = arith.constant 0 : index
    %c0_19 = arith.constant 0 : index
    %28 = vector.load %arg8[%c0_18, %c0_19] : memref<16x1xf32, #tpu.memory_space<vmem>>, vector<16x1xf32>
    tpu.vector_store %arg8[%c0_18, %c0_19], %27 {strides = array<i32>} : memref<16x1xf32, #tpu.memory_space<vmem>>, vector<16x1xf32>,
    return
  }
  func.func @transform_0(%arg0: i32) -> (i32, i32) {
    %c0_i32 = arith.constant 0 : i32
    %c0_i32_0 = arith.constant 0 : i32
    return %arg0, %c0_i32 : i32, i32
  }
  func.func @transform_1(%arg0: i32) -> (i32, i32) {
    %c0_i32 = arith.constant 0 : i32
    %c0_i32_0 = arith.constant 0 : i32
    %c0_i32_1 = arith.constant 0 : i32
    return %c0_i32, %c0_i32_0 : i32, i32
  }
  func.func @transform_2(%arg0: i32) -> (i32, i32) {
    %c0_i32 = arith.constant 0 : i32
    %c0_i32_0 = arith.constant 0 : i32
    %c0_i32_1 = arith.constant 0 : i32
    return %c0_i32, %c0_i32_0 : i32, i32
  }
  func.func @transform_3(%arg0: i32) -> (i32, i32) {
    %c0_i32 = arith.constant 0 : i32
    %c0_i32_0 = arith.constant 0 : i32
    %c0_i32_1 = arith.constant 0 : i32
    return %c0_i32, %c0_i32_0 : i32, i32
  }
  func.func @transform_4(%arg0: i32) -> (i32, i32) {
    %c0_i32 = arith.constant 0 : i32
    %c0_i32_0 = arith.constant 0 : i32
    %c0_i32_1 = arith.constant 0 : i32
    return %c0_i32, %c0_i32_0 : i32, i32
  }
  func.func @transform_5(%arg0: i32) -> (i32, i32) {
    %c0_i32 = arith.constant 0 : i32
    %c0_i32_0 = arith.constant 0 : i32
    %c0_i32_1 = arith.constant 0 : i32
    return %c0_i32, %c0_i32_0 : i32, i32
  }
  func.func @transform_6(%arg0: i32) -> (i32, i32) {
    %c0_i32 = arith.constant 0 : i32
    %c0_i32_0 = arith.constant 0 : i32
    %c0_i32_1 = arith.constant 0 : i32
    return %c0_i32, %c0_i32_0 : i32, i32
  }
  func.func @transform_7(%arg0: i32) -> (i32, i32) {
    %c0_i32 = arith.constant 0 : i32
    %c0_i32_0 = arith.constant 0 : i32
    return %arg0, %c0_i32 : i32, i32
  }
}

</mosaic_0001>

<llo_original>
// kernel: tpu_custom_call.1
$region0: #{tpu_custom_call.1}
  #allocation0 [shape = 'u32[]', space=smem, size = 0x4, offset = 0x4, fixed_abs, tag = 'smem constant byte address 0x4 - core index']
  #allocation1 [shape = 'u32[144,128]{1,0:T(1,128)}', space=vmem, size = 0x12000, scoped, tag = 'internal scratch']
  #allocation2 [shape = 'f32[1,1]{1,0:T(1,128)S(1)}', space=vmem, size = 0x200, scoped, tag = 'scoped memory for tpu_custom_call.1']
  %s0 = inlined_call_operand.vmem [shape: f32[16,32], index: 0, kind: input, shape index: {}]
  %s1 = inlined_call_operand.vmem [shape: f32[32,64], index: 1, kind: input, shape index: {}]
  %s2 = inlined_call_operand.vmem [shape: f32[1,64], index: 2, kind: input, shape index: {}]
  %s3 = inlined_call_operand.vmem [shape: f32[64,32], index: 3, kind: input, shape index: {}]
  %s4 = inlined_call_operand.vmem [shape: f32[1,32], index: 4, kind: input, shape index: {}]
  %s5 = inlined_call_operand.vmem [shape: f32[1,32], index: 5, kind: input, shape index: {}]
  %s6 = inlined_call_operand.<no memory space> [shape: f32[1,1], index: 6, kind: input, shape index: {}]
  %s7 = inlined_call_operand.vmem [shape: f32[16,1], index: 7, kind: output, shape index: {}]
  %s8 = sld [smem:[#allocation0]]
  $region38: #{tpu_custom_call.1} parent=0
    _
  %s10 = ssub.s32 1, %s8
  %s11 = scalar_select 0, %s10, %s8
  %v12 = vstv %s6
  %13 = vst [vmem:[#allocation2] sm:$0x1] %v12
  // Predicated region
  $region2: #{tpu_custom_call.1} parent=0 // pred_check
    _
  $region3: #{tpu_custom_call.1} parent=0 // pred_check_branch
    %15 = sbr.rel (0) target = $region5
  $region4: #{tpu_custom_call.1} parent=0 // pred_region
    _
  $region5: #{tpu_custom_call.1} parent=0 // pred_fallthru
    _
  // Predicated region
  $region6: #{tpu_custom_call.1} parent=0 // pred_check
    _
  $region7: #{tpu_custom_call.1} parent=0 // pred_check_branch
    %17 = sbr.rel (0) target = $region9
  $region8: #{tpu_custom_call.1} parent=0 // pred_region
    _
  $region9: #{tpu_custom_call.1} parent=0 // pred_fallthru
    _
  // Predicated region
  $region10: #{tpu_custom_call.1} parent=0 // pred_check
    _
  $region11: #{tpu_custom_call.1} parent=0 // pred_check_branch
    %19 = sbr.rel (0) target = $region13
  $region12: #{tpu_custom_call.1} parent=0 // pred_region
    _
  $region13: #{tpu_custom_call.1} parent=0 // pred_fallthru
    _
  // Predicated region
  $region14: #{tpu_custom_call.1} parent=0 // pred_check
    _
  $region15: #{tpu_custom_call.1} parent=0 // pred_check_branch
    %21 = sbr.rel (0) target = $region17
  $region16: #{tpu_custom_call.1} parent=0 // pred_region
    _
  $region17: #{tpu_custom_call.1} parent=0 // pred_fallthru
    _
  // Predicated region
  $region18: #{tpu_custom_call.1} parent=0 // pred_check
    _
  $region19: #{tpu_custom_call.1} parent=0 // pred_check_branch
    %23 = sbr.rel (0) target = $region21
  $region20: #{tpu_custom_call.1} parent=0 // pred_region
    _
  $region21: #{tpu_custom_call.1} parent=0 // pred_fallthru
    _
  // Predicated region
  $region22: #{tpu_custom_call.1} parent=0 // pred_check
    _
  $region23: #{tpu_custom_call.1} parent=0 // pred_check_branch
    %25 = sbr.rel (0) target = $region25
  $region24: #{tpu_custom_call.1} parent=0 // pred_region
    _
  $region25: #{tpu_custom_call.1} parent=0 // pred_fallthru
    _
  // Predicated region
  $region26: #{tpu_custom_call.1} parent=0 // pred_check
    _
  $region27: #{tpu_custom_call.1} parent=0 // pred_check_branch
    %27 = sbr.rel (0) target = $region29
  $region28: #{tpu_custom_call.1} parent=0 // pred_region
    _
  $region29: #{tpu_custom_call.1} parent=0 // pred_fallthru
    _
  %v28 = vld [vmem:[%s0] sm:$0xff]
  %v29 = vld [vmem:[%s0 + $0x8] sm:$0xff]
  %v30 = vld [vmem:[%s1] sm:$0xff]
  %v31 = vld [vmem:[%s1 + $0x8] sm:$0xff]
  %v32 = vld [vmem:[%s1 + $0x10] sm:$0xff]
  %v33 = vld [vmem:[%s1 + $0x18] sm:$0xff]
  %v34 = vld [vmem:[%s2] sm:$0x1]
  %v36 = vlaneseq
  %v37 = vshrl.u32 %v36, 7
  %v38 = vsub.s32 0, %v37
  %v39 = vrot.slane %v34, %v38
  %vm41 = vcmask 261120
  %v43 = vsel %vm41, %v28, 0
  %v46 = vsel %vm41, %v29, 0
  %48 = vmatprep.subr.mxu0 0.0
  %49 = vmatpush1.msra.mxu0 %v30
  %50 = vmatprep.subr.mxu0 0.0
  %51 = vmatpush1.msra.mxu0 %v31
  %52 = vmatprep.subr.mxu0 0.0
  %53 = vmatpush1.msra.mxu0 %v32
  %54 = vmatprep.subr.mxu0 0.0
  %55 = vmatpush1.msra.mxu0 %v33
  %56 = vmatprep.subr.mxu0 0.0
  %57 = vmatpush1.msra.mxu0 0.0
  %58 = vmatprep.subr.mxu0 0.0
  %59 = vmatpush1.msra.mxu0 0.0
  %60 = vmatprep.subr.mxu0 0.0
  %61 = vmatpush1.msra.mxu0 0.0
  %62 = vmatprep.subr.mxu0 0.0
  %63 = vmatpush1.msra.mxu0 0.0
  %64 = vmatprep.subr.mxu0 0.0
  %65 = vmatpush1.msra.mxu0 0.0
  %66 = vmatprep.subr.mxu0 0.0
  %67 = vmatpush1.msra.mxu0 0.0
  %68 = vmatprep.subr.mxu0 0.0
  %69 = vmatpush1.msra.mxu0 0.0
  %70 = vmatprep.subr.mxu0 0.0
  %71 = vmatpush1.msra.mxu0 0.0
  %72 = vmatprep.subr.mxu0 0.0
  %73 = vmatpush1.msra.mxu0 0.0
  %74 = vmatprep.subr.mxu0 0.0
  %75 = vmatpush1.msra.mxu0 0.0
  %76 = vmatprep.subr.mxu0 0.0
  %77 = vmatpush1.msra.mxu0 0.0
  %78 = vmatprep.subr.mxu0 0.0
  %79 = vmatpush1.msra.mxu0 0.0
  %80 = vmatprep.subr.mxu0 0.0
  %81 = vmatpush1.msra.mxu0 0.0
  %82 = vmatprep.subr.mxu0 0.0
  %83 = vmatpush1.msra.mxu0 0.0
  %84 = vmatprep.subr.mxu0 0.0
  %85 = vmatpush1.msra.mxu0 0.0
  %86 = vmatprep.subr.mxu0 0.0
  %87 = vmatpush1.msra.mxu0 0.0
  %88 = vmatprep.subr.mxu0 0.0
  %89 = vmatpush1.msra.mxu0 0.0
  %90 = vmatprep.subr.mxu0 0.0
  %91 = vmatpush1.msra.mxu0 0.0
  %92 = vmatprep.subr.mxu0 0.0
  %93 = vmatpush1.msra.mxu0 0.0
  %94 = vmatprep.subr.mxu0 0.0
  %95 = vmatpush1.msra.mxu0 0.0
  %96 = vmatprep.subr.mxu0 0.0
  %97 = vmatpush1.msra.mxu0 0.0
  %98 = vmatprep.subr.mxu0 0.0
  %99 = vmatpush1.msra.mxu0 0.0
  %100 = vmatprep.subr.mxu0 0.0
  %101 = vmatpush1.msra.mxu0 0.0
  %102 = vmatprep.subr.mxu0 0.0
  %103 = vmatpush1.msra.mxu0 0.0
  %104 = vmatprep.subr.mxu0 0.0
  %105 = vmatpush1.msra.mxu0 0.0
  %106 = vmatprep.subr.mxu0 0.0
  %107 = vmatpush1.msra.mxu0 0.0
  %108 = vmatprep.subr.mxu0 0.0
  %109 = vmatpush1.msra.mxu0 0.0
  %110 = vmatprep.subr.mxu0 0.0
  %111 = vmatpush1.msra.mxu0 0.0
  %112 = vmatprep.mubr.f32.mxu0 0.0
  %113 = vmatmul.mubr.f32.gmra.mrb[0].mxu0 %v43
  %v114 = vpop.f32.mrb[0].mxu0
  %v115 = vadd.f32 %v39, %v114
  %v116 = vpop.f32.mrb[0].mxu0
  %117 = vmatprep.mubr.f32.mxu0 0.0
  %118 = vmatmul.mubr.f32.gmra.mrb[0].mxu0 %v46
  %v119 = vpop.f32.mrb[0].mxu0
  %v120 = vadd.f32 %v39, %v119
  %v121 = vpop.f32.mrb[0].mxu0
  %122 = vdwg.mxu0
  %v123 = vmax.f32 %v115, 0.0
  %v124 = vmax.f32 %v120, 0.0
  %v125 = vld [vmem:[%s3] sm:$0xff]
  %v126 = vld [vmem:[%s3 + $0x8] sm:$0xff]
  %v127 = vld [vmem:[%s3 + $0x10] sm:$0xff]
  %v128 = vld [vmem:[%s3 + $0x18] sm:$0xff]
  %v129 = vld [vmem:[%s3 + $0x20] sm:$0xff]
  %v130 = vld [vmem:[%s3 + $0x28] sm:$0xff]
  %v131 = vld [vmem:[%s3 + $0x30] sm:$0xff]
  %v132 = vld [vmem:[%s3 + $0x38] sm:$0xff]
  %v133 = vld [vmem:[%s4] sm:$0x1]
  %v135 = vlaneseq
  %v136 = vshrl.u32 %v135, 7
  %v137 = vsub.s32 0, %v136
  %v138 = vrot.slane %v133, %v137
  %vm140 = vcmask 523264
  %v142 = vsel %vm140, %v123, 0
  %v145 = vsel %vm140, %v124, 0
  %147 = vmatprep.subr.mxu0 0.0
  %148 = vmatpush1.msra.mxu0 %v125
  %149 = vmatprep.subr.mxu0 0.0
  %150 = vmatpush1.msra.mxu0 %v126
  %151 = vmatprep.subr.mxu0 0.0
  %152 = vmatpush1.msra.mxu0 %v127
  %153 = vmatprep.subr.mxu0 0.0
  %154 = vmatpush1.msra.mxu0 %v128
  %155 = vmatprep.subr.mxu0 0.0
  %156 = vmatpush1.msra.mxu0 %v129
  %157 = vmatprep.subr.mxu0 0.0
  %158 = vmatpush1.msra.mxu0 %v130
  %159 = vmatprep.subr.mxu0 0.0
  %160 = vmatpush1.msra.mxu0 %v131
  %161 = vmatprep.subr.mxu0 0.0
  %162 = vmatpush1.msra.mxu0 %v132
  %163 = vmatprep.subr.mxu0 0.0
  %164 = vmatpush1.msra.mxu0 0.0
  %165 = vmatprep.subr.mxu0 0.0
  %166 = vmatpush1.msra.mxu0 0.0
  %167 = vmatprep.subr.mxu0 0.0
  %168 = vmatpush1.msra.mxu0 0.0
  %169 = vmatprep.subr.mxu0 0.0
  %170 = vmatpush1.msra.mxu0 0.0
  %171 = vmatprep.subr.mxu0 0.0
  %172 = vmatpush1.msra.mxu0 0.0
  %173 = vmatprep.subr.mxu0 0.0
  %174 = vmatpush1.msra.mxu0 0.0
  %175 = vmatprep.subr.mxu0 0.0
  %176 = vmatpush1.msra.mxu0 0.0
  %177 = vmatprep.subr.mxu0 0.0
  %178 = vmatpush1.msra.mxu0 0.0
  %179 = vmatprep.subr.mxu0 0.0
  %180 = vmatpush1.msra.mxu0 0.0
  %181 = vmatprep.subr.mxu0 0.0
  %182 = vmatpush1.msra.mxu0 0.0
  %183 = vmatprep.subr.mxu0 0.0
  %184 = vmatpush1.msra.mxu0 0.0
  %185 = vmatprep.subr.mxu0 0.0
  %186 = vmatpush1.msra.mxu0 0.0
  %187 = vmatprep.subr.mxu0 0.0
  %188 = vmatpush1.msra.mxu0 0.0
  %189 = vmatprep.subr.mxu0 0.0
  %190 = vmatpush1.msra.mxu0 0.0
  %191 = vmatprep.subr.mxu0 0.0
  %192 = vmatpush1.msra.mxu0 0.0
  %193 = vmatprep.subr.mxu0 0.0
  %194 = vmatpush1.msra.mxu0 0.0
  %195 = vmatprep.subr.mxu0 0.0
  %196 = vmatpush1.msra.mxu0 0.0
  %197 = vmatprep.subr.mxu0 0.0
  %198 = vmatpush1.msra.mxu0 0.0
  %199 = vmatprep.subr.mxu0 0.0
  %200 = vmatpush1.msra.mxu0 0.0
  %201 = vmatprep.subr.mxu0 0.0
  %202 = vmatpush1.msra.mxu0 0.0
  %203 = vmatprep.subr.mxu0 0.0
  %204 = vmatpush1.msra.mxu0 0.0
  %205 = vmatprep.subr.mxu0 0.0
  %206 = vmatpush1.msra.mxu0 0.0
  %207 = vmatprep.subr.mxu0 0.0
  %208 = vmatpush1.msra.mxu0 0.0
  %209 = vmatprep.subr.mxu0 0.0
  %210 = vmatpush1.msra.mxu0 0.0
  %211 = vmatprep.mubr.f32.mxu0 0.0
  %212 = vmatmul.mubr.f32.gmra.mrb[0].mxu0 %v142
  %v213 = vpop.f32.mrb[0].mxu0
  %v214 = vadd.f32 %v138, %v213
  %v215 = vpop.f32.mrb[0].mxu0
  %216 = vmatprep.mubr.f32.mxu0 0.0
  %217 = vmatmul.mubr.f32.gmra.mrb[0].mxu0 %v145
  %v218 = vpop.f32.mrb[0].mxu0
  %v219 = vadd.f32 %v138, %v218
  %v220 = vpop.f32.mrb[0].mxu0
  %221 = vdwg.mxu0
  %v222 = vmax.f32 %v214, 0.0
  %v223 = vmax.f32 %v219, 0.0
  %v224 = vld [vmem:[%s5] sm:$0x1]
  %v226 = vlaneseq
  %v227 = vshrl.u32 %v226, 7
  %v228 = vsub.s32 0, %v227
  %v229 = vrot.slane %v224, %v228
  %v231 = vmul.f32 %v222, %v229
  %v232 = vmul.f32 %v223, %v229
  %v233 = vsel %vm41, %v231, 0.0
  %234 = vadd.xlane.f32.xlu0 %v233
  %v235 = vpop.xlane.xlu0 %234
  %v236 = vsel %vm41, %v232, 0.0
  %237 = vadd.xlane.f32.xlu0 %v236
  %v238 = vpop.xlane.xlu0 %237
  %v239 = vld [vmem:[#allocation2] sm:$0x1]
  %v241 = vlaneseq
  %v242 = vshrl.u32 %v241, 7
  %v243 = vsub.s32 0, %v242
  %v244 = vrot.slane %v239, %v243
  %v246 = vadd.f32 %v235, %v244
  %v247 = vadd.f32 %v238, %v244
  %v248 = vxor.u32 %v246, 2147483648
  %v249 = vxor.u32 %v247, 2147483648
  %v250 = vmul.f32 %v248, 1.442695
  %v251 = vpow.pop %v250
  %v252 = vmul.f32 %v249, 1.442695
  %v253 = vpow.pop %v252
  %v254 = vadd.f32 %v251, 1.0
  %v255 = vadd.f32 %v253, 1.0
  %v256 = vrcp.pop %v254
  %v257 = vmul.f32 1.0, %v256
  %v258 = vrcp.pop %v255
  %v259 = vmul.f32 1.0, %v258
  %vm260 = vcmask 7168
  %261 = vst.msk [vmem:[%s7] sm:$0xff] %vm260, %v257
  %262 = vst.msk [vmem:[%s7 + $0x8] sm:$0xff] %vm260, %v259
  // Predicated region
  $region30: #{tpu_custom_call.1} parent=0 // pred_check
    _
  $region31: #{tpu_custom_call.1} parent=0 // pred_check_branch
    %264 = sbr.rel (0) target = $region33
  $region32: #{tpu_custom_call.1} parent=0 // pred_region
    _
  $region33: #{tpu_custom_call.1} parent=0 // pred_fallthru
    _
  // Predicated region
  $region34: #{tpu_custom_call.1} parent=0 // pred_check
    _
  $region35: #{tpu_custom_call.1} parent=0 // pred_check_branch
    %266 = sbr.rel (0) target = $region37
  $region36: #{tpu_custom_call.1} parent=0 // pred_region
    _
  $region37: #{tpu_custom_call.1} parent=0 // pred_fallthru
    _

</llo_original>
